<compile_context>
chip_gen: v6e
topology: v6e:2x2x1
jax: 0.10.0
libtpu: 0.0.40
codegen_flags: <defaults>
</compile_context>

<pallas_src>
import jax
import jax.numpy as jnp
from jax.experimental import pallas as pl
from jax.experimental.pallas import tpu as pltpu

_LANE = 128


# -----------------------------------------------------------------------------
# Kernel
# -----------------------------------------------------------------------------
def _conv1x1_kernel(x_ref, w_ref, o_ref):
    # x_ref: (TILE_B, Cin, TILE_S)   w_ref: (Cout, Cin)   o_ref: (TILE_B, Cout, TILE_S)
    tb = x_ref.shape[0]
    cout, cin = w_ref.shape
    # Tiny weight broadcast once per grid step; batched MXU matmul per image
    # (same batched-einsum pattern as the flash-attention reference kernel).
    w = jnp.broadcast_to(w_ref[...], (tb, cout, cin))
    o_ref[...] = jnp.einsum(
        "boc,bcm->bom", w, x_ref[...], preferred_element_type=jnp.float32
    ).astype(o_ref.dtype)


# -----------------------------------------------------------------------------
# Tiling heuristics
# -----------------------------------------------------------------------------
def _largest_spatial_tile(m, cap):
    """Largest lane-dense spatial tile <= cap.

    Prefer a multiple of 128 that divides m (unmasked stores); otherwise the
    largest multiple of 128 <= cap (Pallas masks the ragged edge block); if
    m <= 128 fall back to the full extent (always legal under the (8,128) rule).
    """
    if m <= _LANE:
        return m
    cap = max(_LANE, min(m, cap))
    top = (cap // _LANE) * _LANE
    t = top
    while t >= _LANE:
        if m % t == 0:
            return t
        t -= _LANE
    return top


def _largest_batch_tile(n, cap):
    cap = max(1, min(n, cap))
    for t in range(cap, 0, -1):
        if n % t == 0:
            return t
    return 1


def _pick_tiles(n, m, cin, cout, itemsize,
                data_budget_bytes=8 << 20,   # one copy of (in + out) tile bytes
                max_tile_s=32768,
                max_tile_b=128):
    per_col_bytes = (cin + cout) * itemsize
    budget_cols = max(_LANE, data_budget_bytes // per_col_bytes)
    tile_s = _largest_spatial_tile(m, min(max_tile_s, budget_cols))
    tile_b = _largest_batch_tile(n, min(max_tile_b, budget_cols // max(tile_s, 1)))
    # v7x megacore: keep >= 2 grid steps on the parallel axes when possible so
    # both TensorCores get work (one extra ~0.35 us step is noise on 1-TC chips).
    if pl.cdiv(n, tile_b) * pl.cdiv(m, tile_s) < 2:
        if n >= 2:
            tile_b = _largest_batch_tile(n, n // 2)
        elif tile_s >= 2 * _LANE:
            tile_s = _largest_spatial_tile(m, tile_s // 2)
    return tile_b, tile_s


# -----------------------------------------------------------------------------
# Wrapper
# -----------------------------------------------------------------------------
def downsample_c(x, weight, stride):
    """Forward pass of DownsampleC.

    x:      (N, Cin, H, W)  float32, NCHW (PyTorch convention)
    weight: (Cout, Cin, 1, 1) float32 (Conv2d weight, bias=False)
    returns (N, Cout, Ho, Wo) with Ho = floor((H-1)/stride)+1
    """
    n, cin, h, w = x.shape
    cout = weight.shape[0]

    # 1x1 kernel, padding=0 -> strided slice gives exactly the conv output grid.
    # Kept in XLA but fused into the Pallas input DMA via allow_input_fusion,
    # so no compacted copy is written back to HBM first.
    xs = x if stride == 1 else x[:, :, ::stride, ::stride]
    ho, wo = xs.shape[2], xs.shape[3]
    m = ho * wo

    xm = xs.reshape(n, cin, m)                  # (N, Cin, M) — no transpose
    wm = weight.reshape(cout, cin)              # (Cout, Cin)

    itemsize = jnp.dtype(x.dtype).itemsize
    tile_b, tile_s = _pick_tiles(n, m, cin, cout, itemsize)
    grid = (pl.cdiv(n, tile_b), pl.cdiv(m, tile_s))

    flops = 2 * n * m * cin * cout
    bytes_accessed = (n * cin * m + cout * cin + n * cout * m) * itemsize

    out_flat = pl.pallas_call(
        _conv1x1_kernel,
        out_shape=jax.ShapeDtypeStruct((n, cout, m), x.dtype),
        grid=grid,
        in_specs=[
            # X: block = (TILE_B, Cin, TILE_S); full-Cin sublanes, lane-dense spatial.
            pl.BlockSpec((tile_b, cin, tile_s), lambda b, s: (b, 0, s)),
            # Weight: constant block index -> DMA'd once, stays VMEM-resident.
            pl.BlockSpec((cout, cin), lambda b, s: (0, 0)),
        ],
        # Lane-dense output block (Cout sublanes x TILE_S lanes) -> unmasked stores.
        out_specs=pl.BlockSpec((tile_b, cout, tile_s), lambda b, s: (b, 0, s)),
        compiler_params=pltpu.CompilerParams(
            dimension_semantics=("parallel", "parallel"),
            vmem_limit_bytes=40 * 1024 * 1024,
            allow_input_fusion=[True, False],
        ),
        cost_estimate=pl.CostEstimate(
            flops=flops, transcendentals=0, bytes_accessed=bytes_accessed
        ),
    )(xm, wm)

    # (N, Cout, M) -> (N, Cout, Ho, Wo): pure metadata reshape.
    return out_flat.reshape(n, cout, ho, wo)


def reference(x, weight, stride):
    # Exact f32 reference (elementwise multiply + sum; no MXU precision modes).
    xs = x[:, :, ::stride, ::stride]
    w2 = weight.reshape(weight.shape[0], weight.shape[1])
    return (xs[:, None, :, :, :] * w2[None, :, :, None, None]).sum(axis=2)


if __name__ == "__main__":
    key = jax.random.PRNGKey(0)
    kx, kw = jax.random.split(key)

    # Module config consistent with DownsampleC assert (stride != 1 or nIn != nOut)
    n_in, n_out, stride = 4, 8, 2
    batch, spatial = 2, 16

    x = jax.random.normal(kx, (batch, n_in, spatial, spatial), dtype=jnp.float32)
    fan_in = n_in * 1 * 1
    bound = 1.0 / (fan_in ** 0.5)
    weight = jax.random.uniform(
        kw, (n_out, n_in, 1, 1), dtype=jnp.float32, minval=-bound, maxval=bound
    )

    ds = jax.jit(downsample_c, static_argnums=2)   # jit so the slice fuses into the kernel

    # 1) Basic stride-2 path (TILE_B == 1).
    out = jax.block_until_ready(ds(x, weight, stride))
    ref = reference(x, weight, stride)
    assert out.shape == (batch, n_out, spatial // stride, spatial // stride), out.shape
    assert jnp.allclose(out, ref, atol=1e-3, rtol=1e-3), "mismatch vs reference"

    # 2) stride=1 path with a large lane-dense spatial tile (M = 4096).
    x2 = jax.random.normal(kx, (2, n_in, 64, 64), dtype=jnp.float32)
    out2 = jax.block_until_ready(ds(x2, weight, 1))
    ref2 = reference(x2, weight, 1)
    assert out2.shape == (2, n_out, 64, 64), out2.shape
    assert jnp.allclose(out2, ref2, atol=1e-3, rtol=1e-3), "mismatch vs reference (wide tile)"

    # 3) Larger batch: exercises the batch-tiled (TILE_B > 1) kernel path.
    x3 = jax.random.normal(kx, (8, n_in, spatial, spatial), dtype=jnp.float32)
    out3 = jax.block_until_ready(ds(x3, weight, stride))
    ref3 = reference(x3, weight, stride)
    assert out3.shape == (8, n_out, spatial // stride, spatial // stride), out3.shape
    assert jnp.allclose(out3, ref3, atol=1e-3, rtol=1e-3), "mismatch vs reference (batch tile)"

    print("KERNEL_OK")
</pallas_src>

<mosaic_0001>
module attributes {stable_mosaic.version = 11 : i64} {
  func.func @_conv1x1_kernel(%arg0: i32, %arg1: i32, %arg2: memref<1x4x64xf32, #tpu.memory_space<vmem>>, %arg3: memref<8x4xf32, #tpu.memory_space<vmem>>, %arg4: memref<1x8x64xf32, #tpu.memory_space<vmem>>) attributes {dimension_semantics = [#tpu.dimension_semantics<parallel>, #tpu.dimension_semantics<parallel>], iteration_bounds = array<i64: 2, 1>, scalar_prefetch = 0 : i64, scratch_operands = 0 : i64, tpu.core_type = #tpu.core_type<tc>, window_params = [{transform_indices = @transform_0, window_bounds = array<i64: 1, 4, 64>}, {pipeline_mode = #tpu.pipeline_mode<synchronous>, transform_indices = @transform_1, window_bounds = array<i64: 8, 4>}, {transform_indices = @transform_2, window_bounds = array<i64: 1, 8, 64>}]} {
    %c0 = arith.constant 0 : index
    %c0_0 = arith.constant 0 : index
    %0 = vector.load %arg3[%c0, %c0_0] : memref<8x4xf32, #tpu.memory_space<vmem>>, vector<8x4xf32>
    %1 = vector.shape_cast %0 : vector<8x4xf32> to vector<1x8x4xf32>
    %c0_1 = arith.constant 0 : index
    %c0_2 = arith.constant 0 : index
    %c0_3 = arith.constant 0 : index
    %2 = vector.load %arg2[%c0_1, %c0_2, %c0_3] : memref<1x4x64xf32, #tpu.memory_space<vmem>>, vector<1x4x64xf32>
    "tpu.trace_start"() <{level = 10 : i32, message = "boc,bcm->bom"}> : () -> ()
    %cst = arith.constant dense<0.000000e+00> : vector<1x8x64xf32>
    %3 = tpu.matmul %1, %2, %cst {dimension_numbers = #tpu.dot_dimension_numbers<[2], [1], [1], [2], [0, 0, 0, 1, 1, 2], [0], [0]>} : vector<1x8x4xf32>, vector<1x4x64xf32>, vector<1x8x64xf32> -> vector<1x8x64xf32>
    "tpu.trace_stop"() : () -> ()
    %c0_4 = arith.constant 0 : index
    %c0_5 = arith.constant 0 : index
    %c0_6 = arith.constant 0 : index
    %4 = vector.load %arg4[%c0_4, %c0_5, %c0_6] : memref<1x8x64xf32, #tpu.memory_space<vmem>>, vector<1x8x64xf32>
    tpu.vector_store %arg4[%c0_4, %c0_5, %c0_6], %3 {strides = array<i32>} : memref<1x8x64xf32, #tpu.memory_space<vmem>>, vector<1x8x64xf32>,
    return
  }
  func.func @transform_0(%arg0: i32, %arg1: i32) -> (i32, i32, i32) {
    %c0_i32 = arith.constant 0 : i32
    %c0_i32_0 = arith.constant 0 : i32
    return %arg0, %c0_i32, %arg1 : i32, i32, i32
  }
  func.func @transform_1(%arg0: i32, %arg1: i32) -> (i32, i32) {
    %c0_i32 = arith.constant 0 : i32
    %c0_i32_0 = arith.constant 0 : i32
    %c0_i32_1 = arith.constant 0 : i32
    return %c0_i32, %c0_i32_0 : i32, i32
  }
  func.func @transform_2(%arg0: i32, %arg1: i32) -> (i32, i32, i32) {
    %c0_i32 = arith.constant 0 : i32
    %c0_i32_0 = arith.constant 0 : i32
    return %arg0, %c0_i32, %arg1 : i32, i32, i32
  }
}

</mosaic_0001>

<llo_original>
// kernel: downsample_c.1
$region0: #{downsample_c.1}
  #allocation0 [shape = 'u32[]', space=smem, size = 0x4, offset = 0x4, fixed_abs, tag = 'smem constant byte address 0x4 - core index']
  #allocation1 [shape = 'u32[144,128]{1,0:T(1,128)}', space=vmem, size = 0x12000, scoped, tag = 'internal scratch']
  %s0 = inlined_call_operand.vmem [shape: f32[2,4,64], index: 0, kind: input, shape index: {}]
  %s1 = inlined_call_operand.vmem [shape: f32[8,4], index: 1, kind: input, shape index: {}]
  %s2 = inlined_call_operand.vmem [shape: f32[2,8,64], index: 2, kind: output, shape index: {}]
  %s3 = sld [smem:[#allocation0]]
  $region41: #{downsample_c.1} parent=0
    _
  %s5 = ssub.s32 1, %s3
  %s6 = scalar_select 0, %s5, %s3
  loop: start=0, step=1, limit=4
  $region2: #{downsample_c.1} parent=0 // loop_pre_header
    _
  $region3: #{downsample_c.1} parent=0 // loop_header
    %s8 = sphi 0, %s12
    %p9 = scmp.ge.s32.totalorder %s8, 4
    %s15 = sphi 0, %s27
    %s16 = sphi 0, %s23
    %s17 = sphi 0, %s15
    %s18 = sphi 0, %s16
    %s19 = sphi 0, %s17
    %s20 = sphi 0, %s18
    %s32 = sphi 0, %s34
    %s35 = sphi 0, %s32
    %s36 = sphi 0, %s35
    %s52 = sphi 0, %s36
    %s56 = sphi 0, %s56
    %s58 = sphi 0, %s56
    %s59 = sphi 0, %s58
    %s73 = sphi 0, %s59
    %s81 = sphi 0, %s83
    %s84 = sphi 0, %s81
    %s85 = sphi 0, %s84
    %s101 = sphi 0, %s85
  $region4: #{downsample_c.1} parent=0 // loop_header_branch
    %11 = sbr.rel (%p9) target = $region8
  $region5: #{downsample_c.1} parent=0 // loop_body
    %s13 = ssub.s32 %s8, 1
    %s14 = ssub.s32 %s8, 2
    %s21 = sadd.s32 1, %s16
    %p22 = scmp.ge.s32.totalorder %s21, 1
    %s23 = scalar_select %p22, 0, %s21
    %s24 = sadd.s32 1, %s15
    %s25 = scalar_select %p22, %s24, %s15
    %p26 = scmp.ge.s32.totalorder %s25, 2
    %s27 = scalar_select %p26, 0, %s25
    %s28 = ssub.s32 %s15, %s27
    %s29 = ssub.s32 %s16, %s23
    %s30 = sor.u32 %s28, %s29
    %p31 = scmp.eq.s32.totalorder %s30, 0
    %s33 = sadd.s32 %s32, 1
    %s34 = scalar_select %p31, %s32, %s33
    %p37 = pneg %p31
    %p38 = scmp.eq.s32.totalorder %s8, 1
    %p39 = por %p37, %p38
    %p40 = scmp.ne.s32.totalorder %s32, %s35
    %p41 = scmp.eq.s32.totalorder %s8, 0
    %p42 = por %p40, %p41
    %p43 = scmp.ne.s32.totalorder %s32, %s35
    %p44 = scmp.eq.s32.totalorder %s13, 1
    %p45 = por %p43, %p44
    %p46 = scmp.ne.s32.totalorder %s35, %s36
    %p47 = scmp.eq.s32.totalorder %s13, 0
    %p48 = por %p46, %p47
    %p49 = scmp.ne.s32.totalorder %s35, %s36
    %p50 = scmp.eq.s32.totalorder %s14, 1
    %p51 = por %p49, %p50
    %p53 = scmp.ne.s32.totalorder %s36, %s52
    %p54 = scmp.eq.s32.totalorder %s14, 0
    %p55 = por %p53, %p54
    %s57 = sadd.s32 %s56, 1
    %p60 = scmp.eq.s32.totalorder %s8, 1
    %p61 = scmp.ne.s32.totalorder %s56, %s58
    %p62 = scmp.eq.s32.totalorder %s8, 0
    %p63 = por %p61, %p62
    %p64 = scmp.ne.s32.totalorder %s56, %s58
    %p65 = scmp.eq.s32.totalorder %s13, 1
    %p66 = por %p64, %p65
    %p67 = scmp.ne.s32.totalorder %s58, %s59
    %p68 = scmp.eq.s32.totalorder %s13, 0
    %p69 = por %p67, %p68
    %p70 = scmp.ne.s32.totalorder %s58, %s59
    %p71 = scmp.eq.s32.totalorder %s14, 1
    %p72 = por %p70, %p71
    %p74 = scmp.ne.s32.totalorder %s59, %s73
    %p75 = scmp.eq.s32.totalorder %s14, 0
    %p76 = por %p74, %p75
    %s77 = ssub.s32 %s15, %s27
    %s78 = ssub.s32 %s16, %s23
    %s79 = sor.u32 %s77, %s78
    %p80 = scmp.eq.s32.totalorder %s79, 0
    %s82 = sadd.s32 %s81, 1
    %s83 = scalar_select %p80, %s81, %s82
    %p86 = pneg %p80
    %p87 = scmp.eq.s32.totalorder %s8, 1
    %p88 = por %p86, %p87
    %p89 = scmp.ne.s32.totalorder %s81, %s84
    %p90 = scmp.eq.s32.totalorder %s8, 0
    %p91 = por %p89, %p90
    %p92 = scmp.ne.s32.totalorder %s81, %s84
    %p93 = scmp.eq.s32.totalorder %s13, 1
    %p94 = por %p92, %p93
    %p95 = scmp.ne.s32.totalorder %s84, %s85
    %p96 = scmp.eq.s32.totalorder %s13, 0
    %p97 = por %p95, %p96
    %p98 = scmp.ne.s32.totalorder %s84, %s85
    %p99 = scmp.eq.s32.totalorder %s14, 1
    %p100 = por %p98, %p99
    %p102 = scmp.ne.s32.totalorder %s85, %s101
    %p103 = scmp.eq.s32.totalorder %s14, 0
    %p104 = por %p102, %p103
    %p105 = scmp.le.s32.totalorder 1, %s8
    %p106 = scmp.lt.s32.totalorder %s8, 3
    %p107 = pnand %p105, %p106
    %p108 = pneg %p107
    // Predicated region
    $region9: #{downsample_c.1} parent=5 // pred_check
      _
    $region10: #{downsample_c.1} parent=5 // pred_check_branch
      %110 = sbr.rel (%p107) target = $region12
    $region11: #{downsample_c.1} parent=5 // pred_region
      %s111 = ssub.s32 %s8, 1
      // Predicated region
      $region13: #{downsample_c.1} parent=11 // pred_check
        %p112 = pneg %p69
      $region14: #{downsample_c.1} parent=11 // pred_check_branch
        %114 = sbr.rel (%p112) target = $region16
      $region15: #{downsample_c.1} parent=11 // pred_region
        _
      $region16: #{downsample_c.1} parent=11 // pred_fallthru
        _
    $region12: #{downsample_c.1} parent=5 // pred_fallthru
      _
    %p115 = scmp.lt.s32.totalorder %s8, 2
    // Predicated region
    $region17: #{downsample_c.1} parent=5 // pred_check
      %p116 = pneg %p115
    $region18: #{downsample_c.1} parent=5 // pred_check_branch
      %118 = sbr.rel (%p116) target = $region20
    $region19: #{downsample_c.1} parent=5 // pred_region
      // Predicated region
      $region21: #{downsample_c.1} parent=19 // pred_check
        %p119 = pneg %p42
      $region22: #{downsample_c.1} parent=19 // pred_check_branch
        %121 = sbr.rel (%p119) target = $region24
      $region23: #{downsample_c.1} parent=19 // pred_region
        %p122 = scmp.lt.s32.totalorder %s15, 1
        %s123 = scalar_select %p122, %s15, 1
        %p124 = scmp.lt.s32.totalorder %s16, 0
        %s125 = scalar_select %p124, %s16, 0
        %s126 = sadd.s32 %s125, %s123
        %s127 = smul.addr %s126, 4
        %s128 = scalar_lea.vmem %s0, %s127
      $region24: #{downsample_c.1} parent=19 // pred_fallthru
        _
    $region20: #{downsample_c.1} parent=5 // pred_fallthru
      _
    %p129 = scmp.le.s32.totalorder 1, %s8
    %p130 = scmp.lt.s32.totalorder %s8, 3
    %p131 = pnand %p129, %p130
    %p132 = pneg %p131
    // Predicated region
    $region25: #{downsample_c.1} parent=5 // pred_check
      _
    $region26: #{downsample_c.1} parent=5 // pred_check_branch
      %134 = sbr.rel (%p131) target = $region28
    $region27: #{downsample_c.1} parent=5 // pred_region
      %s135 = ssub.s32 %s8, 1
      %p136 = scmp.lt.s32.totalorder %s17, 1
      %s137 = scalar_select %p136, %s17, 1
      %p138 = scmp.lt.s32.totalorder %s18, 0
      %s139 = scalar_select %p138, %s18, 0
      %s140 = sadd.s32 %s139, %s137
      %s141 = smul.addr %s140, 4
      %s142 = scalar_lea.vmem %s0, %s141
      %p143 = pneg %p48
      %p144 = pneg %p45
      %p145 = pneg %p69
      %p146 = pneg %p66
      %p147 = pneg %p97
      %p148 = pneg %p94
      %p149 = scmp.lt.s32.totalorder %s17, 1
      %s150 = scalar_select %p149, %s17, 1
      %p151 = scmp.lt.s32.totalorder %s18, 0
      %s152 = scalar_select %p151, %s18, 0
      %s153 = sadd.s32 %s152, %s150
      %s154 = smul.addr %s153, 8
      %s155 = scalar_lea.vmem %s2, %s154
      %p156 = scmp.lt.s32.totalorder %s17, 1
      %s157 = scalar_select %p156, %s17, 1
      %p158 = scmp.lt.s32.totalorder %s18, 0
      %s159 = scalar_select %p158, %s18, 0
      %s160 = sadd.s32 %s159, %s157
      %s161 = smul.addr %s160, 4
      %s162 = scalar_lea.vmem %s0, %s161
      %p163 = scmp.lt.s32.totalorder %s17, 1
      %s164 = scalar_select %p163, %s17, 1
      %p165 = scmp.lt.s32.totalorder %s18, 0
      %s166 = scalar_select %p165, %s18, 0
      %s167 = sadd.s32 %s166, %s164
      %s168 = smul.addr %s167, 8
      %s169 = scalar_lea.vmem %s2, %s168
      %v170 = vld [vmem:[%s1] sm:$0xff]
      %v171 = vld [vmem:[%s162] sm:$0xf]
      %vm172 = vcmask 31744
      %v174 = vsel %vm172, %v170, 0
      %vm176 = vcmask 1043456
      %v178 = vsel %vm176, %v171, 0
      %180 = vmatprep.subr.mxu0 0.0
      %181 = vmatpush1.msra.mxu0 0.0
      %182 = vmatprep.subr.mxu0 0.0
      %183 = vmatpush1.msra.mxu0 0.0
      %184 = vmatprep.subr.mxu0 0.0
      %185 = vmatpush1.msra.mxu0 0.0
      %186 = vmatprep.subr.mxu0 0.0
      %187 = vmatpush1.msra.mxu0 0.0
      %188 = vmatprep.subr.mxu0 0.0
      %189 = vmatpush1.msra.mxu0 0.0
      %190 = vmatprep.subr.mxu0 0.0
      %191 = vmatpush1.msra.mxu0 0.0
      %192 = vmatprep.subr.mxu0 0.0
      %193 = vmatpush1.msra.mxu0 0.0
      %194 = vmatprep.subr.mxu0 0.0
      %195 = vmatpush1.msra.mxu0 0.0
      %196 = vmatprep.subr.mxu0 0.0
      %197 = vmatpush1.msra.mxu0 0.0
      %198 = vmatprep.subr.mxu0 0.0
      %199 = vmatpush1.msra.mxu0 0.0
      %200 = vmatprep.subr.mxu0 0.0
      %201 = vmatpush1.msra.mxu0 0.0
      %202 = vmatprep.subr.mxu0 0.0
      %203 = vmatpush1.msra.mxu0 0.0
      %204 = vmatprep.subr.mxu0 0.0
      %205 = vmatpush1.msra.mxu0 0.0
      %206 = vmatprep.subr.mxu0 0.0
      %207 = vmatpush1.msra.mxu0 0.0
      %208 = vmatprep.subr.mxu0 0.0
      %209 = vmatpush1.msra.mxu0 0.0
      %210 = vmatprep.subr.mxu0 0.0
      %211 = vmatpush1.msra.mxu0 %v178
      %212 = vmatprep.subr.mxu0 0.0
      %213 = vmatpush2.msra.mxu0 0.0
      %214 = vmatprep.subr.mxu0 0.0
      %215 = vmatpush2.msra.mxu0 0.0
      %216 = vmatprep.subr.mxu0 0.0
      %217 = vmatpush2.msra.mxu0 0.0
      %218 = vmatprep.subr.mxu0 0.0
      %219 = vmatpush2.msra.mxu0 0.0
      %220 = vmatprep.subr.mxu0 0.0
      %221 = vmatpush2.msra.mxu0 0.0
      %222 = vmatprep.subr.mxu0 0.0
      %223 = vmatpush2.msra.mxu0 0.0
      %224 = vmatprep.subr.mxu0 0.0
      %225 = vmatpush2.msra.mxu0 0.0
      %226 = vmatprep.subr.mxu0 0.0
      %227 = vmatpush2.msra.mxu0 0.0
      %228 = vmatprep.subr.mxu0 0.0
      %229 = vmatpush2.msra.mxu0 0.0
      %230 = vmatprep.subr.mxu0 0.0
      %231 = vmatpush2.msra.mxu0 0.0
      %232 = vmatprep.subr.mxu0 0.0
      %233 = vmatpush2.msra.mxu0 0.0
      %234 = vmatprep.subr.mxu0 0.0
      %235 = vmatpush2.msra.mxu0 0.0
      %236 = vmatprep.subr.mxu0 0.0
      %237 = vmatpush2.msra.mxu0 0.0
      %238 = vmatprep.subr.mxu0 0.0
      %239 = vmatpush2.msra.mxu0 0.0
      %240 = vmatprep.subr.mxu0 0.0
      %241 = vmatpush2.msra.mxu0 0.0
      %242 = vmatprep.subr.mxu0 0.0
      %243 = vmatpush2.msra.mxu0 0.0
      %244 = vmatprep.mubr.f32.mxu0 0.0
      %245 = vmatmul.mubr.f32.gmra.mxu0 %v174
      %v246 = vpop.f32.mrf.mxu0
      %v247 = vadd.f32 0.0, %v246
      %v248 = vpop.f32.mrf.mxu0
      %249 = vdwg.mxu0
      %vm250 = vcmask 523264
      %251 = vst.msk [vmem:[%s169] sm:$0xff] %vm250, %v247
      %p252 = scmp.lt.s32.totalorder %s17, 1
      %s253 = scalar_select %p252, %s17, 1
      %p254 = scmp.lt.s32.totalorder %s18, 0
      %s255 = scalar_select %p254, %s18, 0
      %s256 = sadd.s32 %s255, %s253
      %s257 = smul.addr %s256, 8
      %s258 = scalar_lea.vmem %s2, %s257
      // Predicated region
      $region29: #{downsample_c.1} parent=27 // pred_check
        %p259 = pneg %p94
      $region30: #{downsample_c.1} parent=27 // pred_check_branch
        %261 = sbr.rel (%p259) target = $region32
      $region31: #{downsample_c.1} parent=27 // pred_region
        _
      $region32: #{downsample_c.1} parent=27 // pred_fallthru
        _
    $region28: #{downsample_c.1} parent=5 // pred_fallthru
      _
    %p262 = scmp.le.s32.totalorder 2, %s8
    // Predicated region
    $region33: #{downsample_c.1} parent=5 // pred_check
      %p263 = pneg %p262
    $region34: #{downsample_c.1} parent=5 // pred_check_branch
      %265 = sbr.rel (%p263) target = $region36
    $region35: #{downsample_c.1} parent=5 // pred_region
      %s266 = ssub.s32 %s8, 2
      // Predicated region
      $region37: #{downsample_c.1} parent=35 // pred_check
        %p267 = pneg %p100
      $region38: #{downsample_c.1} parent=35 // pred_check_branch
        %269 = sbr.rel (%p267) target = $region40
      $region39: #{downsample_c.1} parent=35 // pred_region
        %p270 = scmp.lt.s32.totalorder %s19, 1
        %s271 = scalar_select %p270, %s19, 1
        %p272 = scmp.lt.s32.totalorder %s20, 0
        %s273 = scalar_select %p272, %s20, 0
        %s274 = sadd.s32 %s273, %s271
        %s275 = smul.addr %s274, 8
        %s276 = scalar_lea.vmem %s2, %s275
      $region40: #{downsample_c.1} parent=35 // pred_fallthru
        _
    $region36: #{downsample_c.1} parent=5 // pred_fallthru
      _
  $region6: #{downsample_c.1} parent=0 // loop_footer
    %s12 = sadd.s32 1, %s8
  $region7: #{downsample_c.1} parent=0 // loop_footer_branch
    %7 = sbr.rel target = $region3
  $region8: #{downsample_c.1} parent=0 // loop_exit
    _

</llo_original>
